<compile_context>
chip_gen: v6e
topology: v6e:2x2x1
jax: 0.10.0
libtpu: 0.0.40
codegen_flags: <defaults>
</compile_context>

<pallas_src>
import functools

import jax
import jax.numpy as jnp
from jax import lax
from jax.experimental import pallas as pl
from jax.experimental.pallas import tpu as pltpu


# ---------------------------------------------------------------------------
# Single-step kernel (== nn.Module.forward): two dots + bias + tanh, all VMEM.
# ---------------------------------------------------------------------------
def _rnn_cell_kernel(x_ref, h_ref, w_in_ref, w_rec_ref, b_ref, o_ref):
    r = jnp.dot(h_ref[...], w_rec_ref[...], preferred_element_type=jnp.float32)
    u = jnp.dot(x_ref[...], w_in_ref[...], preferred_element_type=jnp.float32)
    o_ref[...] = jnp.tanh(r + u + b_ref[...]).astype(o_ref.dtype)


def simple_recurrent_cell(x, hidden, w_input, w_recurrent, bias, *,
                          compute_dtype=jnp.bfloat16, out_dtype=jnp.float32):
    """One SimpleRecurrentCell step: tanh(hidden @ W_rec + x @ W_in + bias)."""
    B = x.shape[0]
    H = hidden.shape[1]
    vmem = pl.BlockSpec(memory_space=pltpu.MemorySpace.VMEM)
    return pl.pallas_call(
        _rnn_cell_kernel,
        out_shape=jax.ShapeDtypeStruct((B, H), out_dtype),
        in_specs=[vmem] * 5,
        out_specs=vmem,
    )(x.astype(compute_dtype), hidden.astype(compute_dtype),
      w_input.astype(compute_dtype), w_recurrent.astype(compute_dtype),
      bias.reshape(1, H).astype(jnp.float32))


# ---------------------------------------------------------------------------
# Sequence kernel: grid = (batch tiles [parallel], time blocks [arbitrary]),
# tc timesteps per grid step, hidden state carried in VMEM scratch,
# W_rec VMEM-resident across the whole recurrence.
# ---------------------------------------------------------------------------
def _rnn_seq_kernel(h0_ref, u_ref, w_rec_ref, out_ref, h_scr, *, steps):
    @pl.when(pl.program_id(1) == 0)
    def _():
        h_scr[...] = h0_ref[...]                      # (re)load carried state per batch tile

    def step(i, h):
        # h: (tb, H) f32 carried in vregs across the unrolled inner loop.
        r = jnp.dot(h.astype(w_rec_ref.dtype), w_rec_ref[...],
                    preferred_element_type=jnp.float32)
        h_new = jnp.tanh(r + u_ref[i])                # u already holds x@W_in + bias (f32)
        out_ref[i] = h_new.astype(out_ref.dtype)
        return h_new

    # steps is small & static -> fully unrolled; keeps the MXU pipeline visible
    # to the scheduler and avoids per-iteration loop overhead.
    h_scr[...] = lax.fori_loop(0, steps, step, h_scr[...], unroll=True)


def simple_recurrent_cell_sequence(x_seq, hidden0, w_input, w_recurrent, bias, *,
                                   time_block=8, batch_block=None,
                                   compute_dtype=jnp.bfloat16,
                                   out_dtype=jnp.float32):
    """Apply the cell over T steps inside one kernel; returns all hidden states (T, B, H)."""
    T, B, _ = x_seq.shape
    H = hidden0.shape[1]
    tb = B if batch_block is None else batch_block
    tc = min(time_block, T)
    if T % tc or B % tb:
        raise ValueError(f"time_block ({tc}) must divide T ({T}) and "
                         f"batch_block ({tb}) must divide B ({B}).")

    # Hoist the input projection out of the recurrence: one MXU-efficient
    # (T*B, I) x (I, H) matmul + bias instead of a degenerate K=I dot per step.
    u_seq = (jnp.einsum("tbi,ih->tbh",
                        x_seq.astype(compute_dtype), w_input.astype(compute_dtype),
                        preferred_element_type=jnp.float32)
             + bias.astype(jnp.float32))

    w_rec = w_recurrent.astype(compute_dtype)
    h0 = hidden0.astype(jnp.float32)

    kernel = functools.partial(_rnn_seq_kernel, steps=tc)

    # TODO(synk): for very large H on v7x (64 MiB VMEM) single-buffer W_rec
    # (pipeline_mode=pl.Buffered(1)) and/or tile its N dim and raise
    # vmem_limit_bytes; unnecessary at these shapes.
    return pl.pallas_call(
        kernel,
        out_shape=jax.ShapeDtypeStruct((T, B, H), out_dtype),
        grid=(B // tb, T // tc),                               # batch tiles outer, time inner
        in_specs=[
            pl.BlockSpec((tb, H), lambda b, t: (b, 0)),        # h0, read at t==0 per tile
            pl.BlockSpec((tc, tb, H), lambda b, t: (t, b, 0)), # u_t blocks, lane-dense stream
            pl.BlockSpec((H, H), lambda b, t: (0, 0)),         # W_rec, VMEM-resident
        ],
        out_specs=pl.BlockSpec((tc, tb, H), lambda b, t: (t, b, 0)),
        scratch_shapes=[pltpu.VMEM((tb, H), jnp.float32)],     # carried hidden state
        compiler_params=pltpu.CompilerParams(
            # Batch tiles are independent (v7x: sharded across the 2 TCs).
            # The time axis MUST remain 'arbitrary' and innermost (sequential recurrence).
            dimension_semantics=("parallel", "arbitrary"),
        ),
    )(h0, u_seq, w_rec)


# ---------------------------------------------------------------------------
# Parameter init mirroring the PyTorch __init__ (orthogonal W_rec via SVD).
# ---------------------------------------------------------------------------
def init_params(key, hidden_size, input_size):
    k1, k2, k3 = jax.random.split(key, 3)
    a = jax.random.normal(k1, (hidden_size, hidden_size), dtype=jnp.float32)
    u, _, vh = jnp.linalg.svd(a, full_matrices=False)
    w_recurrent = u @ vh.T                                   # == U @ V in torch.svd convention
    w_input = jax.random.normal(k2, (input_size, hidden_size), dtype=jnp.float32)
    # Module inits bias to zeros; use a small nonzero bias so the bias-add path
    # is actually exercised by the numerical check.
    bias = 0.1 * jax.random.normal(k3, (hidden_size,), dtype=jnp.float32)
    return w_input, w_recurrent, bias


def _ref_step(x, h, w_input, w_recurrent, bias, compute_dtype=jnp.bfloat16):
    """Pure-JAX reference for one step, matching the kernel's bf16/f32 mix."""
    r = jnp.dot(h.astype(compute_dtype), w_recurrent.astype(compute_dtype),
                preferred_element_type=jnp.float32)
    u = jnp.dot(x.astype(compute_dtype), w_input.astype(compute_dtype),
                preferred_element_type=jnp.float32)
    return jnp.tanh(r + u + bias.astype(jnp.float32))


if __name__ == "__main__":
    batch, hidden_size, input_size, seq_len = 16, 128, 4, 16

    key = jax.random.PRNGKey(0)
    kp, kx, kh, ks = jax.random.split(key, 4)

    w_input, w_recurrent, bias = init_params(kp, hidden_size, input_size)
    x = jax.random.normal(kx, (batch, input_size), dtype=jnp.float32)
    hidden = jax.random.normal(kh, (batch, hidden_size), dtype=jnp.float32)
    x_seq = jax.random.normal(ks, (seq_len, batch, input_size), dtype=jnp.float32)

    # --- single step (== nn.Module.forward) ---
    out = jax.block_until_ready(
        simple_recurrent_cell(x, hidden, w_input, w_recurrent, bias))
    ref = _ref_step(x, hidden, w_input, w_recurrent, bias)
    assert out.shape == (batch, hidden_size)
    assert jnp.allclose(out, ref, atol=1e-2, rtol=1e-2)

    # --- full recurrence (T steps) in ONE kernel: 2 batch tiles x 2 time blocks ---
    out_seq = jax.block_until_ready(
        simple_recurrent_cell_sequence(x_seq, hidden, w_input, w_recurrent, bias,
                                       time_block=8, batch_block=8))
    h = hidden
    ref_steps = []
    for t in range(seq_len):
        h = _ref_step(x_seq[t], h, w_input, w_recurrent, bias)
        ref_steps.append(h)
    ref_seq = jnp.stack(ref_steps, axis=0)
    assert out_seq.shape == (seq_len, batch, hidden_size)
    assert jnp.allclose(out_seq, ref_seq, atol=1e-2, rtol=1e-2)

    print("KERNEL_OK")
</pallas_src>

<mosaic_0001>
module attributes {stable_mosaic.version = 11 : i64} {
  func.func @_rnn_cell_kernel(%arg0: memref<16x4xbf16, #tpu.memory_space<vmem>>, %arg1: memref<16x128xbf16, #tpu.memory_space<vmem>>, %arg2: memref<4x128xbf16, #tpu.memory_space<vmem>>, %arg3: memref<128x128xbf16, #tpu.memory_space<vmem>>, %arg4: memref<1x128xf32, #tpu.memory_space<vmem>>, %arg5: memref<16x128xf32, #tpu.memory_space<vmem>>) attributes {dimension_semantics = [], scalar_prefetch = 0 : i64, scratch_operands = 0 : i64, tpu.core_type = #tpu.core_type<tc>} {
    %c0 = arith.constant 0 : index
    %c0_0 = arith.constant 0 : index
    %0 = vector.load %arg1[%c0, %c0_0] : memref<16x128xbf16, #tpu.memory_space<vmem>>, vector<16x128xbf16>
    %c0_1 = arith.constant 0 : index
    %c0_2 = arith.constant 0 : index
    %1 = vector.load %arg3[%c0_1, %c0_2] : memref<128x128xbf16, #tpu.memory_space<vmem>>, vector<128x128xbf16>
    %cst = arith.constant dense<0.000000e+00> : vector<16x128xf32>
    %2 = tpu.matmul %0, %1, %cst {dimension_numbers = #tpu.dot_dimension_numbers<[1], [0], [0], [1], [0, 0, 1, 1], [], []>} : vector<16x128xbf16>, vector<128x128xbf16>, vector<16x128xf32> -> vector<16x128xf32>
    %c0_3 = arith.constant 0 : index
    %c0_4 = arith.constant 0 : index
    %3 = vector.load %arg0[%c0_3, %c0_4] : memref<16x4xbf16, #tpu.memory_space<vmem>>, vector<16x4xbf16>
    %c0_5 = arith.constant 0 : index
    %c0_6 = arith.constant 0 : index
    %4 = vector.load %arg2[%c0_5, %c0_6] : memref<4x128xbf16, #tpu.memory_space<vmem>>, vector<4x128xbf16>
    %cst_7 = arith.constant dense<0.000000e+00> : vector<16x128xf32>
    %5 = tpu.matmul %3, %4, %cst_7 {dimension_numbers = #tpu.dot_dimension_numbers<[1], [0], [0], [1], [0, 0, 1, 1], [], []>} : vector<16x4xbf16>, vector<4x128xbf16>, vector<16x128xf32> -> vector<16x128xf32>
    %6 = arith.addf %2, %5 : vector<16x128xf32>
    %c0_8 = arith.constant 0 : index
    %c0_9 = arith.constant 0 : index
    %7 = vector.load %arg4[%c0_8, %c0_9] : memref<1x128xf32, #tpu.memory_space<vmem>>, vector<1x128xf32>
    %8 = vector.broadcast %7 : vector<1x128xf32> to vector<16x128xf32>
    %9 = arith.addf %6, %8 : vector<16x128xf32>
    %10 = math.tanh %9 : vector<16x128xf32>
    %c0_10 = arith.constant 0 : index
    %c0_11 = arith.constant 0 : index
    %11 = vector.load %arg5[%c0_10, %c0_11] : memref<16x128xf32, #tpu.memory_space<vmem>>, vector<16x128xf32>
    tpu.vector_store %arg5[%c0_10, %c0_11], %10 {strides = array<i32>} : memref<16x128xf32, #tpu.memory_space<vmem>>, vector<16x128xf32>,
    return
  }
}

</mosaic_0001>

<llo_original>
// kernel: tpu_custom_call.1
$region0: #{tpu_custom_call.1}
  #allocation0 [shape = 'u32[]', space=smem, size = 0x4, offset = 0x4, fixed_abs, tag = 'smem constant byte address 0x4 - core index']
  #allocation1 [shape = 'u32[144,128]{1,0:T(1,128)}', space=vmem, size = 0x12000, scoped, tag = 'internal scratch']
  %s0 = inlined_call_operand.vmem [shape: bf16[16,4], index: 0, kind: input, shape index: {}]
  %s1 = inlined_call_operand.vmem [shape: bf16[16,128], index: 1, kind: input, shape index: {}]
  %s2 = inlined_call_operand.vmem [shape: bf16[4,128], index: 2, kind: input, shape index: {}]
  %s3 = inlined_call_operand.hbm [shape: bf16[128,128], index: 3, kind: input, shape index: {}]
  %s4 = inlined_call_operand.vmem [shape: f32[1,128], index: 4, kind: input, shape index: {}]
  %s5 = inlined_call_operand.hbm [shape: f32[16,128], index: 5, kind: output, shape index: {}]
  %s6 = sld [smem:[#allocation0]]
  $region34: #{tpu_custom_call.1} parent=0
    _
  %s8 = ssub.s32 1, %s6
  %s9 = scalar_select 0, %s8, %s6
  $region1: #{tpu_custom_call.1} parent=0
    #allocation2 [shape = 'u8[32768]{0}', space=vmem, size = 0x8000, scoped, tag = 'input window, operand 3, single buffered']
    #allocation3 [shape = 's32[1]{0}', space=sflag, size = 0x4, scoped, tag = 'scoped memory for tpu_custom_call.1']
    #allocation4 [shape = 's32[1]{0}', space=sflag, size = 0x4, scoped, tag = 'scoped memory for tpu_custom_call.1']
    #allocation5 [shape = 'u8[8192]{0}', space=vmem, size = 0x2000, scoped, tag = 'output window, operand 0, single buffered']
    %10 = vsyncpa [#allocation3], 0
    %11 = vsyncpa [#allocation4], 0
    // Predicated region
    $region2: #{tpu_custom_call.1} parent=1 // pred_check
      _
    $region3: #{tpu_custom_call.1} parent=1 // pred_check_branch
      %13 = sbr.rel (0) target = $region5
    $region4: #{tpu_custom_call.1} parent=1 // pred_region
      _
    $region5: #{tpu_custom_call.1} parent=1 // pred_fallthru
      _
    // Predicated region
    $region6: #{tpu_custom_call.1} parent=1 // pred_check
      _
    $region7: #{tpu_custom_call.1} parent=1 // pred_check_branch
      %15 = sbr.rel (0) target = $region9
    $region8: #{tpu_custom_call.1} parent=1 // pred_region
      _
    $region9: #{tpu_custom_call.1} parent=1 // pred_fallthru
      _
    // Predicated region
    $region10: #{tpu_custom_call.1} parent=1 // pred_check
      _
    $region11: #{tpu_custom_call.1} parent=1 // pred_check_branch
      %17 = sbr.rel (0) target = $region13
    $region12: #{tpu_custom_call.1} parent=1 // pred_region
      _
    $region13: #{tpu_custom_call.1} parent=1 // pred_fallthru
      _
    // Predicated region
    $region14: #{tpu_custom_call.1} parent=1 // pred_check
      _
    $region15: #{tpu_custom_call.1} parent=1 // pred_check_branch
      %19 = sbr.rel (0) target = $region17
    $region16: #{tpu_custom_call.1} parent=1 // pred_region
      %s21 = ssub.s32 1024, 1024
      %22 = vsyncadd [#allocation3], %s21
      %s23 = sshll.u32 [#allocation2], 4
      %s24 = int_to_ptr.vmem [resolvable:$true] %s23
      %29 = dma.hbm_to_vmem [thread:$0]  %s3, 1024, %s24, [#allocation3], 64, 64, 4
    $region17: #{tpu_custom_call.1} parent=1 // pred_fallthru
      _
    // Predicated region
    $region18: #{tpu_custom_call.1} parent=1 // pred_check
      _
    $region19: #{tpu_custom_call.1} parent=1 // pred_check_branch
      %31 = sbr.rel (0) target = $region21
    $region20: #{tpu_custom_call.1} parent=1 // pred_region
      _
    $region21: #{tpu_custom_call.1} parent=1 // pred_fallthru
      _
    // Predicated region
    $region22: #{tpu_custom_call.1} parent=1 // pred_check
      _
    $region23: #{tpu_custom_call.1} parent=1 // pred_check_branch
      %33 = sbr.rel (0) target = $region25
    $region24: #{tpu_custom_call.1} parent=1 // pred_region
      %34 = dma.done [#allocation3], 1024
    $region25: #{tpu_custom_call.1} parent=1 // pred_fallthru
      _
    %v36 = vld [vmem:[%s1] sm:$0xf]
    %v37 = vld [vmem:[%s1 + $0x4] sm:$0xf]
    %v38 = vld [vmem:[#allocation2] sm:$0xf]
    %v39 = vld [vmem:[#allocation2 + $0x4] sm:$0xf]
    %v40 = vld [vmem:[#allocation2 + $0x8] sm:$0xf]
    %v41 = vld [vmem:[#allocation2 + $0xc] sm:$0xf]
    %v42 = vld [vmem:[#allocation2 + $0x10] sm:$0xf]
    %v43 = vld [vmem:[#allocation2 + $0x14] sm:$0xf]
    %v44 = vld [vmem:[#allocation2 + $0x18] sm:$0xf]
    %v45 = vld [vmem:[#allocation2 + $0x1c] sm:$0xf]
    %v46 = vld [vmem:[#allocation2 + $0x20] sm:$0xf]
    %v47 = vld [vmem:[#allocation2 + $0x24] sm:$0xf]
    %v48 = vld [vmem:[#allocation2 + $0x28] sm:$0xf]
    %v49 = vld [vmem:[#allocation2 + $0x2c] sm:$0xf]
    %v50 = vld [vmem:[#allocation2 + $0x30] sm:$0xf]
    %v51 = vld [vmem:[#allocation2 + $0x34] sm:$0xf]
    %v52 = vld [vmem:[#allocation2 + $0x38] sm:$0xf]
    %v53 = vld [vmem:[#allocation2 + $0x3c] sm:$0xf]
    %v54 = vld [vmem:[%s0] sm:$0xf]
    %v55 = vld [vmem:[%s0 + $0x4] sm:$0xf]
    %v56 = vld [vmem:[%s2] sm:$0x3]
    %v59 = vunpack.c.l.b16 %v54
    %v60 = vunpack.c.l.b16 %v55
    %v61 = vpack.c.b16 %v60, %v59
    %vm62 = vcmask 31744
    %v64 = vsel %vm62, %v61, 0
    %vm66 = vcmask 1041408
    %v68 = vsel %vm66, %v56, 0
    %70 = vmatprep.subr.bf16.mxu0 0
    %71 = vmatpush1.bf16.msra.mxu0 0
    %72 = vmatprep.subr.bf16.mxu0 0
    %73 = vmatpush1.bf16.msra.mxu0 0
    %74 = vmatprep.subr.bf16.mxu0 0
    %75 = vmatpush1.bf16.msra.mxu0 0
    %76 = vmatprep.subr.bf16.mxu0 0
    %77 = vmatpush1.bf16.msra.mxu0 0
    %78 = vmatprep.subr.bf16.mxu0 0
    %79 = vmatpush1.bf16.msra.mxu0 0
    %80 = vmatprep.subr.bf16.mxu0 0
    %81 = vmatpush1.bf16.msra.mxu0 0
    %82 = vmatprep.subr.bf16.mxu0 0
    %83 = vmatpush1.bf16.msra.mxu0 0
    %84 = vmatprep.subr.bf16.mxu0 0
    %85 = vmatpush1.bf16.msra.mxu0 %v68
    %86 = vmatprep.subr.bf16.mxu0 0
    %87 = vmatpush2.bf16.msra.mxu0 0
    %88 = vmatprep.subr.bf16.mxu0 0
    %89 = vmatpush2.bf16.msra.mxu0 0
    %90 = vmatprep.subr.bf16.mxu0 0
    %91 = vmatpush2.bf16.msra.mxu0 0
    %92 = vmatprep.subr.bf16.mxu0 0
    %93 = vmatpush2.bf16.msra.mxu0 0
    %94 = vmatprep.subr.bf16.mxu0 0
    %95 = vmatpush2.bf16.msra.mxu0 0
    %96 = vmatprep.subr.bf16.mxu0 0
    %97 = vmatpush2.bf16.msra.mxu0 0
    %98 = vmatprep.subr.bf16.mxu0 0
    %99 = vmatpush2.bf16.msra.mxu0 0
    %100 = vmatprep.subr.bf16.mxu0 0
    %101 = vmatpush2.bf16.msra.mxu0 0
    %102 = vmatprep.mubr.bf16.mxu0 0
    %103 = vmatmul.mubr.bf16.gmra.mxu0 %v64
    %v104 = vpop.f32.mrf.mxu0
    %v105 = vadd.f32 0.0, %v104
    %v106 = vpop.f32.mrf.mxu0
    %v107 = vpop.f32.mrf.mxu0
    %v108 = vadd.f32 0.0, %v107
    %v109 = vpop.f32.mrf.mxu0
    %110 = vdwg.mxu0
    %v113 = vunpack.c.l.b16 %v36
    %v114 = vunpack.c.l.b16 %v37
    %v115 = vpack.c.b16 %v114, %v113
    %v133 = vunpack.c.l.b16 %v38
    %v134 = vunpack.c.l.b16 %v39
    %v135 = vunpack.c.l.b16 %v40
    %v136 = vunpack.c.l.b16 %v41
    %v137 = vunpack.c.l.b16 %v42
    %v138 = vunpack.c.l.b16 %v43
    %v139 = vunpack.c.l.b16 %v44
    %v140 = vunpack.c.l.b16 %v45
    %v141 = vunpack.c.l.b16 %v46
    %v142 = vunpack.c.l.b16 %v47
    %v143 = vunpack.c.l.b16 %v48
    %v144 = vunpack.c.l.b16 %v49
    %v145 = vunpack.c.l.b16 %v50
    %v146 = vunpack.c.l.b16 %v51
    %v147 = vunpack.c.l.b16 %v52
    %v148 = vunpack.c.l.b16 %v53
    %v149 = vpack.c.b16 %v134, %v133
    %v150 = vpack.c.b16 %v136, %v135
    %v151 = vpack.c.b16 %v138, %v137
    %v152 = vpack.c.b16 %v140, %v139
    %v153 = vpack.c.b16 %v142, %v141
    %v154 = vpack.c.b16 %v144, %v143
    %v155 = vpack.c.b16 %v146, %v145
    %v156 = vpack.c.b16 %v148, %v147
    %165 = vmatprep.subr.bf16.mxu0 0
    %166 = vmatpush1.bf16.msra.mxu0 %v156
    %167 = vmatprep.subr.bf16.mxu0 0
    %168 = vmatpush1.bf16.msra.mxu0 %v155
    %169 = vmatprep.subr.bf16.mxu0 0
    %170 = vmatpush1.bf16.msra.mxu0 %v154
    %171 = vmatprep.subr.bf16.mxu0 0
    %172 = vmatpush1.bf16.msra.mxu0 %v153
    %173 = vmatprep.subr.bf16.mxu0 0
    %174 = vmatpush1.bf16.msra.mxu0 %v152
    %175 = vmatprep.subr.bf16.mxu0 0
    %176 = vmatpush1.bf16.msra.mxu0 %v151
    %177 = vmatprep.subr.bf16.mxu0 0
    %178 = vmatpush1.bf16.msra.mxu0 %v150
    %179 = vmatprep.subr.bf16.mxu0 0
    %180 = vmatpush1.bf16.msra.mxu0 %v149
    %181 = vmatprep.subr.bf16.mxu0 0
    %182 = vmatpush2.bf16.msra.mxu0 0
    %183 = vmatprep.subr.bf16.mxu0 0
    %184 = vmatpush2.bf16.msra.mxu0 0
    %185 = vmatprep.subr.bf16.mxu0 0
    %186 = vmatpush2.bf16.msra.mxu0 0
    %187 = vmatprep.subr.bf16.mxu0 0
    %188 = vmatpush2.bf16.msra.mxu0 0
    %189 = vmatprep.subr.bf16.mxu0 0
    %190 = vmatpush2.bf16.msra.mxu0 0
    %191 = vmatprep.subr.bf16.mxu0 0
    %192 = vmatpush2.bf16.msra.mxu0 0
    %193 = vmatprep.subr.bf16.mxu0 0
    %194 = vmatpush2.bf16.msra.mxu0 0
    %195 = vmatprep.subr.bf16.mxu0 0
    %196 = vmatpush2.bf16.msra.mxu0 0
    %197 = vmatprep.mubr.bf16.mxu0 0
    %198 = vmatmul.mubr.bf16.gmra.mxu0 %v115
    %v199 = vpop.f32.mrf.mxu0
    %v200 = vadd.f32 %v105, %v199
    %v201 = vpop.f32.mrf.mxu0
    %v202 = vpop.f32.mrf.mxu0
    %v203 = vadd.f32 %v108, %v202
    %v204 = vpop.f32.mrf.mxu0
    %205 = vdwg.mxu0
    %v206 = vld [vmem:[%s4] sm:$0x1]
    %v208 = vlaneseq
    %v209 = vshrl.u32 %v208, 7
    %v210 = vsub.s32 0, %v209
    %v211 = vrot.slane %v206, %v210
    %v213 = vadd.f32 %v200, %v211
    %v214 = vadd.f32 %v203, %v211
    %v215 = vtanh.pop %v213
    %v216 = vtanh.pop %v214
    %217 = vst [vmem:[#allocation5] sm:$0xff] %v215
    %218 = vst [vmem:[#allocation5 + $0x8] sm:$0xff] %v216
    // Predicated region
    $region26: #{tpu_custom_call.1} parent=1 // pred_check
      _
    $region27: #{tpu_custom_call.1} parent=1 // pred_check_branch
      %220 = sbr.rel (0) target = $region29
    $region28: #{tpu_custom_call.1} parent=1 // pred_region
      %s222 = ssub.s32 256, 256
      %223 = vsyncadd [#allocation4], %s222
      %s224 = sshll.u32 [#allocation5], 4
      %s225 = int_to_ptr.vmem [resolvable:$true] %s224
      %230 = dma.vmem_to_hbm [thread:$0]  %s225, 256, %s5, [#allocation4], 128, 128, 8
    $region29: #{tpu_custom_call.1} parent=1 // pred_fallthru
      _
    // Predicated region
    $region30: #{tpu_custom_call.1} parent=1 // pred_check
      _
    $region31: #{tpu_custom_call.1} parent=1 // pred_check_branch
      %232 = sbr.rel (0) target = $region33
    $region32: #{tpu_custom_call.1} parent=1 // pred_region
      %233 = dma.done [#allocation4], 256
    $region33: #{tpu_custom_call.1} parent=1 // pred_fallthru
      _
    %234 = vsyncpa [#allocation3], 1
    %235 = vsyncpa [#allocation4], 1

</llo_original>
